<compile_context>
chip_gen: v7x
topology: tpu7x:2x2x1
jax: 0.10.0
libtpu: 0.0.40
codegen_flags: <defaults>
</compile_context>

<pallas_src>
import math

import jax
import jax.numpy as jnp
from jax.experimental import pallas as pl
from jax.experimental.pallas import tpu as pltpu


def adaptor_kernel(x_ref, ab_ref, o_ref):
    # VPU elementwise affine; params kept in f32, result cast on store.
    x = x_ref[...].astype(jnp.float32)
    a = ab_ref[0:1, :]
    b = ab_ref[1:2, :]
    o_ref[...] = (a * x + b).astype(o_ref.dtype)


def _round_up(v, m):
    return (v + m - 1) // m * m


def _sublane_multiple(dtype):
    # f32 -> 8, bf16/f16 -> 16, int8/fp8 -> 32 (sub-32-bit packs along sublanes).
    return max(8, 32 // max(1, jnp.dtype(dtype).itemsize))


def _vmem_capacity_bytes():
    try:
        info = pltpu.get_tpu_info()
        cap = getattr(info, "vmem_capacity_bytes", None)
        if cap:
            return int(cap)
    except Exception:
        pass
    return 64 * 1024 * 1024  # conservative (v7x-sized) fallback


def _maybe_buffered_spec(shape, index_map, n_steps):
    # 3-deep pipelining only when there are many short grid steps; fall back
    # gracefully if this jax version lacks pipeline_mode.
    if n_steps >= 16:
        try:
            return pl.BlockSpec(shape, index_map, pipeline_mode=pl.Buffered(3))
        except TypeError:
            pass
    return pl.BlockSpec(shape, index_map)


def adaptor_forward(x, a, b, mode="generate", mean_w=None, *,
                    xla_fallback_bytes=1 << 20):
    """y = a * x + b via a Pallas TPU kernel.

    x: (..., dim); a, b: (dim,). 'mode' and 'mean_w' are accepted for parity
    with the PyTorch signature but (as in the reference) do not alter the math.
    Inputs smaller than `xla_fallback_bytes` use plain XLA (a standalone
    pallas_call cannot beat a fused elementwise at tiny sizes).
    """
    del mode, mean_w  # both branches of the PyTorch forward are identical

    orig_shape = x.shape
    dim = orig_shape[-1]
    out_dtype = jnp.promote_types(x.dtype, jnp.promote_types(a.dtype, b.dtype))

    x_item = jnp.dtype(x.dtype).itemsize
    out_item = jnp.dtype(out_dtype).itemsize
    item_combined = x_item + out_item

    total_elems = int(x.size)
    if total_elems * item_combined < xla_fallback_bytes:
        return (a.astype(jnp.float32) * x.astype(jnp.float32)
                + b.astype(jnp.float32)).astype(out_dtype).reshape(orig_shape)

    x2 = x.reshape(-1, dim)
    batch = x2.shape[0]

    # --- Lane-dense folding: make the lane axis a multiple of 128 always.
    k = 1 if dim % 128 == 0 else 128 // math.gcd(dim, 128)
    pad_rows = (-batch) % k
    if pad_rows:
        x2 = jnp.pad(x2, ((0, pad_rows), (0, 0)))
    batch_padded = batch + pad_rows
    rows = batch_padded // k
    width = k * dim
    x2 = x2.reshape(rows, width)

    # Params in f32 (single packed (2, width) DMA per step).
    ab = jnp.stack(
        [jnp.tile(a.astype(jnp.float32), k), jnp.tile(b.astype(jnp.float32), k)],
        axis=0,
    )

    # --- Generation-aware VMEM budgeting.
    vmem_cap = _vmem_capacity_bytes()
    # Combined (x + out) tile budget; steady-state live ~= 2x this (+ab).
    tile_budget = max(512 * 1024, min(4 * 1024 * 1024, vmem_cap // 8))
    vmem_limit = int(min(vmem_cap // 2, 32 * 1024 * 1024))

    s = max(_sublane_multiple(x.dtype), _sublane_multiple(out_dtype))

    # --- Lane-axis tiling (only needed for very large width).
    if width * s * item_combined <= tile_budget:
        tw = width
    else:
        lanes = max(128, (tile_budget // (s * item_combined)) // 128 * 128)
        tw = min(width, lanes)

    # --- Row-axis tiling.
    per_row_tile_bytes = max(1, tw * item_combined)
    max_tb = max(s, (tile_budget // per_row_tile_bytes) // s * s)
    total_bytes = rows * width * item_combined
    tiny = total_bytes <= 256 * 1024

    if rows <= s or (tiny and tw == width and rows <= max_tb):
        tb = rows  # single full-extent row block (exempt from (8,128) rule)
    else:
        tb = min(max_tb, 1024, _round_up(rows, s))
        if tw == width:
            # Force >= 2 row blocks: shards across v7x's two TensorCores and
            # lets the pipeline overlap DMA with compute.
            tb = min(tb, _round_up(pl.cdiv(rows, 2), s))
        tb = max(tb, s)
        if tb >= rows:
            tb = rows

    grid = (pl.cdiv(rows, tb), pl.cdiv(width, tw))
    n_steps = grid[0] * grid[1]

    x_spec = _maybe_buffered_spec((tb, tw), lambda i, j: (i, j), n_steps)
    o_spec = _maybe_buffered_spec((tb, tw), lambda i, j: (i, j), n_steps)
    ab_spec = pl.BlockSpec((2, tw), lambda i, j: (0, j))

    cost = pl.CostEstimate(
        flops=2 * rows * width,
        transcendentals=0,
        bytes_accessed=rows * width * item_combined + 2 * width * 4,
    )

    out = pl.pallas_call(
        adaptor_kernel,
        out_shape=jax.ShapeDtypeStruct((rows, width), out_dtype),
        grid_spec=pl.GridSpec(
            grid=grid,
            in_specs=[x_spec, ab_spec],
            out_specs=o_spec,
        ),
        compiler_params=pltpu.CompilerParams(
            dimension_semantics=("parallel", "parallel"),
            vmem_limit_bytes=vmem_limit,
        ),
        cost_estimate=cost,
    )(x2, ab)

    out = out.reshape(batch_padded, dim)[:batch]
    return out.reshape(orig_shape[:-1] + (dim,)).astype(out_dtype)


if __name__ == "__main__":
    key = jax.random.PRNGKey(0)
    k_x, k_a, k_b = jax.random.split(key, 3)

    batch, dim = 8, 32  # small shapes consistent with Adaptor(dim=32)

    x = jax.random.normal(k_x, (batch, dim), dtype=jnp.float32)
    # Deterministic parameter init (stands in for torch.randn(dim)).
    a = jax.random.normal(k_a, (dim,), dtype=jnp.float32)
    b = jax.random.normal(k_b, (dim,), dtype=jnp.float32)

    # xla_fallback_bytes=0 forces the Pallas path even at this demo size.
    y = adaptor_forward(x, a, b, mode="generate", xla_fallback_bytes=0)
    y = jax.block_until_ready(y)

    # Correctness check against plain-JAX reference of the PyTorch semantics.
    y_ref = a * x + b
    assert y.shape == (batch, dim)
    assert jnp.allclose(y, y_ref, atol=1e-6, rtol=1e-6)

    print("KERNEL_OK")
</pallas_src>

<mosaic_0001>
module attributes {stable_mosaic.version = 11 : i64} {
  func.func @adaptor_kernel(%arg0: i32, %arg1: i32, %arg2: memref<2x128xf32, #tpu.memory_space<vmem>>, %arg3: memref<2x128xf32, #tpu.memory_space<vmem>>, %arg4: memref<2x128xf32, #tpu.memory_space<vmem>>) attributes {dimension_semantics = [#tpu.dimension_semantics<parallel>, #tpu.dimension_semantics<parallel>], iteration_bounds = array<i64: 1, 1>, scalar_prefetch = 0 : i64, scratch_operands = 0 : i64, tpu.core_type = #tpu.core_type<tc>, window_params = [{transform_indices = @transform_0, window_bounds = array<i64: 2, 128>}, {transform_indices = @transform_1, window_bounds = array<i64: 2, 128>}, {transform_indices = @transform_2, window_bounds = array<i64: 2, 128>}]} {
    %c0 = arith.constant 0 : index
    %c0_0 = arith.constant 0 : index
    %0 = vector.load %arg2[%c0, %c0_0] : memref<2x128xf32, #tpu.memory_space<vmem>>, vector<2x128xf32>
    %c0_1 = arith.constant 0 : index
    %c0_2 = arith.constant 0 : index
    %1 = vector.load %arg3[%c0_1, %c0_2] : memref<2x128xf32, #tpu.memory_space<vmem>>, vector<1x128xf32>
    %c1 = arith.constant 1 : index
    %c0_3 = arith.constant 0 : index
    %2 = vector.load %arg3[%c1, %c0_3] : memref<2x128xf32, #tpu.memory_space<vmem>>, vector<1x128xf32>
    %3 = vector.broadcast %1 : vector<1x128xf32> to vector<2x128xf32>
    %4 = arith.mulf %3, %0 : vector<2x128xf32>
    %5 = vector.broadcast %2 : vector<1x128xf32> to vector<2x128xf32>
    %6 = arith.addf %4, %5 : vector<2x128xf32>
    %c0_4 = arith.constant 0 : index
    %c0_5 = arith.constant 0 : index
    %7 = vector.load %arg4[%c0_4, %c0_5] : memref<2x128xf32, #tpu.memory_space<vmem>>, vector<2x128xf32>
    tpu.vector_store %arg4[%c0_4, %c0_5], %6 {strides = array<i32>} : memref<2x128xf32, #tpu.memory_space<vmem>>, vector<2x128xf32>,
    return
  }
  func.func @transform_0(%arg0: i32, %arg1: i32) -> (i32, i32) {
    %c0_i32 = arith.constant 0 : i32
    return %arg0, %arg1 : i32, i32
  }
  func.func @transform_1(%arg0: i32, %arg1: i32) -> (i32, i32) {
    %c0_i32 = arith.constant 0 : i32
    %c0_i32_0 = arith.constant 0 : i32
    return %c0_i32, %arg1 : i32, i32
  }
  func.func @transform_2(%arg0: i32, %arg1: i32) -> (i32, i32) {
    %c0_i32 = arith.constant 0 : i32
    return %arg0, %arg1 : i32, i32
  }
}

</mosaic_0001>

<llo_original>
// kernel: tpu_custom_call.1
$region0: #{tpu_custom_call.1}
  #allocation0 [shape = 'u32[]', space=smem, size = 0x4, offset = 0x4, fixed_abs, tag = 'smem constant byte address 0x4 - core index']
  #allocation1 [shape = 'u32[144,128]{1,0:T(1,128)}', space=vmem, size = 0x12000, scoped, tag = 'internal scratch']
  %s0 = inlined_call_operand.hbm [shape: f32[2,128], index: 0, kind: input, shape index: {}]
  %s1 = inlined_call_operand.vmem [shape: f32[2,128], index: 1, kind: input, shape index: {}]
  %s2 = inlined_call_operand.hbm [shape: f32[2,128], index: 2, kind: output, shape index: {}]
  %s3 = sld [smem:[#allocation0]]
  $region22: #{tpu_custom_call.1} parent=0
    _
  %s5 = ssub.s32 1, %s3
  %s6 = scalar_select 0, %s5, %s3
  $region1: #{tpu_custom_call.1} parent=0
    #allocation2 [shape = 'u8[1024]{0}', space=vmem, size = 0x400, scoped, tag = 'input window, operand 0, single buffered']
    #allocation3 [shape = 's32[1]{0}', space=sflag, size = 0x4, scoped, tag = 'scoped memory for tpu_custom_call.1']
    #allocation4 [shape = 's32[1]{0}', space=sflag, size = 0x4, scoped, tag = 'scoped memory for tpu_custom_call.1']
    #allocation5 [shape = 'u8[1024]{0}', space=vmem, size = 0x400, scoped, tag = 'output window, operand 0, single buffered']
    %7 = vsyncpa [#allocation3], 0
    %8 = vsyncpa [#allocation4], 0
    // Predicated region
    $region2: #{tpu_custom_call.1} parent=1 // pred_check
      _
    $region3: #{tpu_custom_call.1} parent=1 // pred_check_branch
      %10 = sbr.rel (0) target = $region5
    $region4: #{tpu_custom_call.1} parent=1 // pred_region
      %s12 = ssub.s32 32, 32
      %13 = vsyncadd [#allocation3], %s12
      %s15 = sshll.u32 [#allocation2], 4
      %s16 = int_to_ptr.vmem [resolvable:$true] %s15
      %18 = dma.hbm_to_vmem [thread:$0]  %s0, 32, %s16, [#allocation3]
    $region5: #{tpu_custom_call.1} parent=1 // pred_fallthru
      _
    // Predicated region
    $region6: #{tpu_custom_call.1} parent=1 // pred_check
      _
    $region7: #{tpu_custom_call.1} parent=1 // pred_check_branch
      %20 = sbr.rel (0) target = $region9
    $region8: #{tpu_custom_call.1} parent=1 // pred_region
      _
    $region9: #{tpu_custom_call.1} parent=1 // pred_fallthru
      _
    // Predicated region
    $region10: #{tpu_custom_call.1} parent=1 // pred_check
      _
    $region11: #{tpu_custom_call.1} parent=1 // pred_check_branch
      %22 = sbr.rel (0) target = $region13
    $region12: #{tpu_custom_call.1} parent=1 // pred_region
      %23 = dma.done [#allocation3], 32
    $region13: #{tpu_custom_call.1} parent=1 // pred_fallthru
      _
    %v24 = vld [vmem:[#allocation2] sm:$0x3]
    %v25 = vld [vmem:[%s1] sm:$0x1]
    %v26 = vld [vmem:[%s1 + $0x1] sm:$0x1]
    %v27 = vlaneseq
    %v28 = vshrl.u32 %v27, 7
    %v29 = vsub.s32 0, %v28
    %v30 = vrot.slane %v25, %v29
    %v31 = vmul.f32 %v30, %v24
    %v32 = vlaneseq
    %v33 = vshrl.u32 %v32, 7
    %v34 = vsub.s32 0, %v33
    %v35 = vrot.slane %v26, %v34
    %v36 = vadd.f32 %v31, %v35
    %37 = vst [vmem:[#allocation5] sm:$0x3] %v36
    // Predicated region
    $region14: #{tpu_custom_call.1} parent=1 // pred_check
      _
    $region15: #{tpu_custom_call.1} parent=1 // pred_check_branch
      %39 = sbr.rel (0) target = $region17
    $region16: #{tpu_custom_call.1} parent=1 // pred_region
      %s41 = ssub.s32 32, 32
      %42 = vsyncadd [#allocation4], %s41
      %s44 = sshll.u32 [#allocation5], 4
      %s45 = int_to_ptr.vmem [resolvable:$true] %s44
      %47 = dma.vmem_to_hbm [thread:$0]  %s45, 32, %s2, [#allocation4]
    $region17: #{tpu_custom_call.1} parent=1 // pred_fallthru
      _
    // Predicated region
    $region18: #{tpu_custom_call.1} parent=1 // pred_check
      _
    $region19: #{tpu_custom_call.1} parent=1 // pred_check_branch
      %49 = sbr.rel (0) target = $region21
    $region20: #{tpu_custom_call.1} parent=1 // pred_region
      %50 = dma.done [#allocation4], 32
    $region21: #{tpu_custom_call.1} parent=1 // pred_fallthru
      _
    %51 = vsyncpa [#allocation3], 1
    %52 = vsyncpa [#allocation4], 1

</llo_original>
